<compile_context>
chip_gen: v6e
topology: v6e:2x2x1
jax: 0.10.0
libtpu: 0.0.40
codegen_flags: <defaults>
</compile_context>

<pallas_src>
import functools

import jax
import jax.numpy as jnp
from jax import lax
from jax.experimental import pallas as pl
from jax.experimental.pallas import tpu as pltpu

NEG_SLOPE = 0.01   # nn.LeakyReLU default
EPS = 1e-5         # nn.BatchNorm1d default


def _resblock_kernel(x_ref, w1_ref, w2_ref, bn_ref, o_ref,
                     hline_ref, p1_ref, p2_ref, *, n_batch, seq_len, ks):
    """grid = (3, N): phase 0 = BN1 stats, phase 1 = conv2 + BN2 stats, phase 2 = finalize."""
    N, L, KS = n_batch, seq_len, ks
    PAD = (KS - 1) // 2
    Cm = w1_ref.shape[0]
    C = x_ref.shape[0]
    inv_cnt = 1.0 / float(N * L)

    phase = pl.program_id(0)
    n = pl.program_id(1)

    x = x_ref[...]                                   # (C, L) current sample, native layout

    @pl.when((phase == 0) & (n == 0))
    def _init():
        # Stat scratches and the padded line buffer.  The PAD seams of the line
        # buffer stay zero forever, providing conv2's zero padding / boundary
        # masking for free (no iota masks, no mask DMA).
        p1_ref[...] = jnp.zeros((Cm, 2), jnp.float32)
        p2_ref[...] = jnp.zeros((C, 2), jnp.float32)
        hline_ref[...] = jnp.zeros((Cm, L + 2 * PAD), jnp.float32)

    # conv1 (ks=1) == one matmul.  Conv bias omitted: it cancels exactly under
    # training-mode BatchNorm.  Recomputed in phase 1 (cheaper than caching z1).
    def conv1():
        return jnp.dot(w1_ref[...], x, preferred_element_type=jnp.float32)   # (Cm, L)

    # ---------------- phase 0: accumulate layer-1 pre-BN batch statistics -------------
    @pl.when(phase == 0)
    def _phase0():
        z1 = conv1()
        p1_ref[:, 0:1] += jnp.sum(z1, axis=1, keepdims=True)
        p1_ref[:, 1:2] += jnp.sum(z1 * z1, axis=1, keepdims=True)

    # ---------------- phase 1: BN1 + LReLU, conv2 tap matmuls, layer-2 stats ----------
    @pl.when(phase == 1)
    def _phase1():
        @pl.when(n == 0)
        def _finalize_bn1():
            # TODO(synk): single-pass E[z^2]-E[z]^2 (f32 + clamp) is fine at these
            # sizes; switch to chunked two-pass / Welford if N*L grows large.
            s, q = p1_ref[:, 0:1], p1_ref[:, 1:2]
            m = s * inv_cnt
            v = jnp.maximum(q * inv_cnt - m * m, 0.0)
            scale = bn_ref[0:Cm, 0:1] * lax.rsqrt(v + EPS)
            p1_ref[:, 0:1] = scale
            p1_ref[:, 1:2] = bn_ref[0:Cm, 1:2] - m * scale      # shift

        h1 = conv1() * p1_ref[:, 0:1] + p1_ref[:, 1:2]
        h1 = jnp.where(h1 >= 0.0, h1, NEG_SLOPE * h1)           # (Cm, L)

        # conv2 (ks=5, pad=2): KS accumulating matmuls over shifted views of the
        # per-sample line buffer (seam columns are permanently zero == zero padding).
        hline_ref[:, PAD:PAD + L] = h1
        z2 = jnp.dot(w2_ref[0], hline_ref[:, 0:L],
                     preferred_element_type=jnp.float32)         # (C, L)
        for k in range(1, KS):                                   # static tap unroll
            z2 = z2 + jnp.dot(w2_ref[k], hline_ref[:, k:k + L],
                              preferred_element_type=jnp.float32)

        p2_ref[:, 0:1] += jnp.sum(z2, axis=1, keepdims=True)
        p2_ref[:, 1:2] += jnp.sum(z2 * z2, axis=1, keepdims=True)
        o_ref[n, :, :] = z2     # stash pre-BN activations in the resident output block

    # ---------------- phase 2: BN2 + LReLU + residual, dense per-sample store ---------
    @pl.when(phase == 2)
    def _phase2():
        @pl.when(n == 0)
        def _finalize_bn2():
            s, q = p2_ref[:, 0:1], p2_ref[:, 1:2]
            m = s * inv_cnt
            v = jnp.maximum(q * inv_cnt - m * m, 0.0)
            scale = bn_ref[:, 2:3] * lax.rsqrt(v + EPS)
            p2_ref[:, 0:1] = scale
            p2_ref[:, 1:2] = bn_ref[:, 3:4] - m * scale

        y = o_ref[n, :, :] * p2_ref[:, 0:1] + p2_ref[:, 1:2]
        y = jnp.where(y >= 0.0, y, NEG_SLOPE * y)
        o_ref[n, :, :] = (y + x).astype(o_ref.dtype)


@jax.jit
def resblock_pallas(x, W1, b1, g1, be1, W2, b2, g2, be2):
    """x: (N, C, L) f32.  W1: (C//2, C, 1), W2: (C, C//2, KS); 1-D bias/BN params.

    b1/b2 are accepted for API parity but unused: adding a per-channel constant
    before training-mode BatchNorm is a mathematical no-op.
    """
    del b1, b2
    N, C, L = x.shape
    Cm = W1.shape[0]
    KS = W2.shape[-1]
    PAD = (KS - 1) // 2

    w1k = W1[:, :, 0]                              # (Cm, C): ks=1 conv == matmul
    w2t = jnp.transpose(W2, (2, 0, 1))             # (KS, C, Cm): per-tap matmul weights

    # Pack the four per-channel BN vectors into one (C, 4) block (single DMA);
    # layer-1 rows zero-padded from Cm to C.
    pad1 = lambda v: jnp.pad(v, (0, C - Cm))
    bn = jnp.stack([pad1(g1), pad1(be1), g2, be2], axis=1).astype(jnp.float32)

    kernel = functools.partial(_resblock_kernel, n_batch=N, seq_len=L, ks=KS)

    # Derive the VMEM budget from the actual blocks instead of hard-coding it.
    est_bytes = 4 * (2 * C * L                                   # double-buffered x tile
                     + N * C * L                                 # resident output block
                     + 2 * (Cm * C + KS * C * Cm + C * 4)        # weights / BN params
                     + Cm * (L + 2 * PAD) + Cm * 2 + C * 2)      # scratch
    vmem_limit = int(min(32 * 1024 * 1024, max(8 * 1024 * 1024, 8 * est_bytes)))

    # TODO(synk): for long L / large C, add an L-tile grid axis (with PAD-halo
    # handling), pad channels to 128/256 and use bf16 matmul operands so the MXU is
    # fed; on v7x mark a tile axis "parallel" with per-core BN partials reduced via CMEM.
    return pl.pallas_call(
        kernel,
        out_shape=jax.ShapeDtypeStruct((N, C, L), x.dtype),
        grid_spec=pltpu.PrefetchScalarGridSpec(
            num_scalar_prefetch=0,
            grid=(3, N),                              # (phase, sample); sample iterates fastest
            in_specs=[
                pl.BlockSpec((None, C, L), lambda p, n: (n, 0, 0)),   # per-sample x tile
                pl.BlockSpec((Cm, C), lambda p, n: (0, 0)),           # conv1 weight (resident)
                pl.BlockSpec((KS, C, Cm), lambda p, n: (0, 0, 0)),    # conv2 taps (resident)
                pl.BlockSpec((C, 4), lambda p, n: (0, 0)),            # packed BN params
            ],
            # Output block = whole array at a constant block index -> stays resident in
            # VMEM across the grid (also stashes pre-BN layer-2 activations between
            # phases 1 and 2) and is written back to HBM exactly once.
            out_specs=pl.BlockSpec((N, C, L), lambda p, n: (0, 0, 0)),
            scratch_shapes=[
                pltpu.VMEM((Cm, L + 2 * PAD), jnp.float32),   # per-sample padded line buffer
                pltpu.VMEM((Cm, 2), jnp.float32),             # BN1 sums -> (scale, shift)
                pltpu.VMEM((C, 2), jnp.float32),              # BN2 sums -> (scale, shift)
            ],
        ),
        compiler_params=pltpu.CompilerParams(
            dimension_semantics=("arbitrary", "arbitrary"),   # phases + cross-sample BN reduction
            vmem_limit_bytes=vmem_limit,
        ),
    )(x, w1k, w2t, bn)


# ---------------------------- pure-JAX reference -----------------------------
def _conv_bn_lrelu_ref(x, Wc, b, gamma, beta):
    ks = Wc.shape[-1]
    pad = (ks - 1) // 2
    y = lax.conv_general_dilated(x, Wc, window_strides=(1,),
                                 padding=[(pad, pad)],
                                 dimension_numbers=("NCH", "OIH", "NCH"))
    y = y + b[None, :, None]
    mean = y.mean(axis=(0, 2), keepdims=True)
    var = ((y - mean) ** 2).mean(axis=(0, 2), keepdims=True)   # biased (training BN)
    y = gamma[None, :, None] * (y - mean) / jnp.sqrt(var + EPS) + beta[None, :, None]
    return jnp.where(y >= 0.0, y, NEG_SLOPE * y)


def resblock_ref(x, W1, b1, g1, be1, W2, b2, g2, be2):
    h = _conv_bn_lrelu_ref(x, W1, b1, g1, be1)
    y = _conv_bn_lrelu_ref(h, W2, b2, g2, be2)
    return y + x


# ----------------------------------- main ------------------------------------
if __name__ == "__main__":
    N, NIN, L = 2, 8, 16
    NMID = NIN // 2
    KS = 5

    key = jax.random.PRNGKey(0)
    ks_ = jax.random.split(key, 10)

    x = jax.random.normal(ks_[0], (N, NIN, L), dtype=jnp.float32)

    # Conv1d(nin, nin//2, ks=1) parameters
    W1 = jax.random.normal(ks_[1], (NMID, NIN, 1), dtype=jnp.float32) * 0.3
    b1 = jax.random.normal(ks_[2], (NMID,), dtype=jnp.float32) * 0.1
    # BatchNorm1d(nin//2) affine parameters
    g1 = 1.0 + 0.1 * jax.random.normal(ks_[3], (NMID,), dtype=jnp.float32)
    be1 = 0.1 * jax.random.normal(ks_[4], (NMID,), dtype=jnp.float32)

    # Conv1d(nin//2, nin, ks=5, padding=2) parameters
    W2 = jax.random.normal(ks_[5], (NIN, NMID, KS), dtype=jnp.float32) * 0.2
    b2 = jax.random.normal(ks_[6], (NIN,), dtype=jnp.float32) * 0.1
    # BatchNorm1d(nin) affine parameters
    g2 = 1.0 + 0.1 * jax.random.normal(ks_[7], (NIN,), dtype=jnp.float32)
    be2 = 0.1 * jax.random.normal(ks_[8], (NIN,), dtype=jnp.float32)

    out = resblock_pallas(x, W1, b1, g1, be1, W2, b2, g2, be2)
    out = jax.block_until_ready(out)

    ref = resblock_ref(x, W1, b1, g1, be1, W2, b2, g2, be2)
    assert out.shape == (N, NIN, L)
    err = float(jnp.max(jnp.abs(out - ref)))
    assert jnp.allclose(out, ref, rtol=1e-4, atol=1e-4), f"max err {err}"

    print("KERNEL_OK")
</pallas_src>

<mosaic_0001>
module attributes {stable_mosaic.version = 11 : i64} {
  func.func @_resblock_kernel(%arg0: i32, %arg1: i32, %arg2: memref<1x8x16xf32, #tpu.memory_space<vmem>>, %arg3: memref<4x8xf32, #tpu.memory_space<vmem>>, %arg4: memref<5x8x4xf32, #tpu.memory_space<vmem>>, %arg5: memref<8x4xf32, #tpu.memory_space<vmem>>, %arg6: memref<2x8x16xf32, #tpu.memory_space<vmem>>, %arg7: memref<4x20xf32, #tpu.memory_space<vmem>>, %arg8: memref<4x2xf32, #tpu.memory_space<vmem>>, %arg9: memref<8x2xf32, #tpu.memory_space<vmem>>) attributes {dimension_semantics = [#tpu.dimension_semantics<arbitrary>, #tpu.dimension_semantics<arbitrary>], iteration_bounds = array<i64: 3, 2>, scalar_prefetch = 0 : i64, scratch_operands = 3 : i64, tpu.core_type = #tpu.core_type<tc>, window_params = [{transform_indices = @transform_0, window_bounds = array<i64: 1, 8, 16>}, {pipeline_mode = #tpu.pipeline_mode<synchronous>, transform_indices = @transform_1, window_bounds = array<i64: 4, 8>}, {pipeline_mode = #tpu.pipeline_mode<synchronous>, transform_indices = @transform_2, window_bounds = array<i64: 5, 8, 4>}, {pipeline_mode = #tpu.pipeline_mode<synchronous>, transform_indices = @transform_3, window_bounds = array<i64: 8, 4>}, {pipeline_mode = #tpu.pipeline_mode<synchronous>, transform_indices = @transform_4, window_bounds = array<i64: 2, 8, 16>}]} {
    %c0 = arith.constant 0 : index
    %c0_0 = arith.constant 0 : index
    %c0_1 = arith.constant 0 : index
    %0 = vector.load %arg2[%c0, %c0_0, %c0_1] : memref<1x8x16xf32, #tpu.memory_space<vmem>>, vector<1x8x16xf32>
    %1 = vector.shape_cast %0 : vector<1x8x16xf32> to vector<8x16xf32>
    %c0_i32 = arith.constant 0 : i32
    %2 = arith.cmpi eq, %arg0, %c0_i32 : i32
    %c0_i32_2 = arith.constant 0 : i32
    %3 = arith.cmpi eq, %arg1, %c0_i32_2 : i32
    %4 = arith.andi %2, %3 : i1
    %5 = arith.extui %4 : i1 to i32
    %c0_i32_3 = arith.constant 0 : i32
    %6 = arith.cmpi ne, %5, %c0_i32_3 : i32
    scf.if %6 {
      %cst = arith.constant 0.000000e+00 : f32
      %16 = vector.broadcast %cst : f32 to vector<4x2xf32>
      %c0_8 = arith.constant 0 : index
      %c0_9 = arith.constant 0 : index
      %17 = vector.load %arg8[%c0_8, %c0_9] : memref<4x2xf32, #tpu.memory_space<vmem>>, vector<4x2xf32>
      tpu.vector_store %arg8[%c0_8, %c0_9], %16 {strides = array<i32>} : memref<4x2xf32, #tpu.memory_space<vmem>>, vector<4x2xf32>,
      %cst_10 = arith.constant 0.000000e+00 : f32
      %18 = vector.broadcast %cst_10 : f32 to vector<8x2xf32>
      %c0_11 = arith.constant 0 : index
      %c0_12 = arith.constant 0 : index
      %19 = vector.load %arg9[%c0_11, %c0_12] : memref<8x2xf32, #tpu.memory_space<vmem>>, vector<8x2xf32>
      tpu.vector_store %arg9[%c0_11, %c0_12], %18 {strides = array<i32>} : memref<8x2xf32, #tpu.memory_space<vmem>>, vector<8x2xf32>,
      %cst_13 = arith.constant 0.000000e+00 : f32
      %20 = vector.broadcast %cst_13 : f32 to vector<4x20xf32>
      %c0_14 = arith.constant 0 : index
      %c0_15 = arith.constant 0 : index
      %21 = vector.load %arg7[%c0_14, %c0_15] : memref<4x20xf32, #tpu.memory_space<vmem>>, vector<4x20xf32>
      tpu.vector_store %arg7[%c0_14, %c0_15], %20 {strides = array<i32>} : memref<4x20xf32, #tpu.memory_space<vmem>>, vector<4x20xf32>,
    } else {
    }
    %c0_i32_4 = arith.constant 0 : i32
    %7 = arith.cmpi eq, %arg0, %c0_i32_4 : i32
    %8 = arith.extui %7 : i1 to i32
    %c0_i32_5 = arith.constant 0 : i32
    %9 = arith.cmpi ne, %8, %c0_i32_5 : i32
    scf.if %9 {
      %c0_8 = arith.constant 0 : index
      %c0_9 = arith.constant 0 : index
      %16 = vector.load %arg3[%c0_8, %c0_9] : memref<4x8xf32, #tpu.memory_space<vmem>>, vector<4x8xf32>
      %cst = arith.constant dense<0.000000e+00> : vector<4x16xf32>
      %17 = tpu.matmul %16, %1, %cst {dimension_numbers = #tpu.dot_dimension_numbers<[1], [0], [0], [1], [0, 0, 1, 1], [], []>} : vector<4x8xf32>, vector<8x16xf32>, vector<4x16xf32> -> vector<4x16xf32>
      %c0_10 = arith.constant 0 : index
      %c0_11 = arith.constant 0 : index
      %18 = vector.load %arg8[%c0_10, %c0_11] : memref<4x2xf32, #tpu.memory_space<vmem>>, vector<4x1xf32>
      %cst_12 = arith.constant dense<0.000000e+00> : vector<4xf32>
      %19 = vector.multi_reduction <add>, %17, %cst_12 [1] : vector<4x16xf32> to vector<4xf32>
      %20 = vector.shape_cast %19 : vector<4xf32> to vector<4x1xf32>
      %21 = arith.addf %18, %20 : vector<4x1xf32>
      %c0_13 = arith.constant 0 : index
      %c0_14 = arith.constant 0 : index
      %22 = vector.load %arg8[%c0_13, %c0_14] : memref<4x2xf32, #tpu.memory_space<vmem>>, vector<4x1xf32>
      tpu.vector_store %arg8[%c0_13, %c0_14], %21 {strides = array<i32>} : memref<4x2xf32, #tpu.memory_space<vmem>>, vector<4x1xf32>,
      %c0_15 = arith.constant 0 : index
      %c1 = arith.constant 1 : index
      %23 = vector.load %arg8[%c0_15, %c1] : memref<4x2xf32, #tpu.memory_space<vmem>>, vector<4x1xf32>
      %24 = arith.mulf %17, %17 : vector<4x16xf32>
      %cst_16 = arith.constant dense<0.000000e+00> : vector<4xf32>
      %25 = vector.multi_reduction <add>, %24, %cst_16 [1] : vector<4x16xf32> to vector<4xf32>
      %26 = vector.shape_cast %25 : vector<4xf32> to vector<4x1xf32>
      %27 = arith.addf %23, %26 : vector<4x1xf32>
      %c0_17 = arith.constant 0 : index
      %c1_18 = arith.constant 1 : index
      %28 = vector.load %arg8[%c0_17, %c1_18] : memref<4x2xf32, #tpu.memory_space<vmem>>, vector<4x1xf32>
      tpu.vector_store %arg8[%c0_17, %c1_18], %27 {strides = array<i32>} : memref<4x2xf32, #tpu.memory_space<vmem>>, vector<4x1xf32>,
    } else {
    }
    %c1_i32 = arith.constant 1 : i32
    %10 = arith.cmpi eq, %arg0, %c1_i32 : i32
    %11 = arith.extui %10 : i1 to i32
    %c0_i32_6 = arith.constant 0 : i32
    %12 = arith.cmpi ne, %11, %c0_i32_6 : i32
    scf.if %12 {
      %c0_i32_8 = arith.constant 0 : i32
      %16 = arith.cmpi eq, %arg1, %c0_i32_8 : i32
      %17 = arith.extui %16 : i1 to i32
      %c0_i32_9 = arith.constant 0 : i32
      %18 = arith.cmpi ne, %17, %c0_i32_9 : i32
      scf.if %18 {
        %c0_58 = arith.constant 0 : index
        %c0_59 = arith.constant 0 : index
        %72 = vector.load %arg8[%c0_58, %c0_59] : memref<4x2xf32, #tpu.memory_space<vmem>>, vector<4x1xf32>
        %c0_60 = arith.constant 0 : index
        %c1_61 = arith.constant 1 : index
        %73 = vector.load %arg8[%c0_60, %c1_61] : memref<4x2xf32, #tpu.memory_space<vmem>>, vector<4x1xf32>
        %cst_62 = arith.constant 3.125000e-02 : f32
        %74 = vector.broadcast %cst_62 : f32 to vector<4x1xf32>
        %75 = arith.mulf %72, %74 : vector<4x1xf32>
        %cst_63 = arith.constant 3.125000e-02 : f32
        %76 = vector.broadcast %cst_63 : f32 to vector<4x1xf32>
        %77 = arith.mulf %73, %76 : vector<4x1xf32>
        %78 = arith.mulf %75, %75 : vector<4x1xf32>
        %79 = arith.subf %77, %78 : vector<4x1xf32>
        %cst_64 = arith.constant 0.000000e+00 : f32
        %80 = vector.broadcast %cst_64 : f32 to vector<4x1xf32>
        %81 = arith.maximumf %79, %80 : vector<4x1xf32>
        %c0_65 = arith.constant 0 : index
        %c0_66 = arith.constant 0 : index
        %82 = vector.load %arg5[%c0_65, %c0_66] : memref<8x4xf32, #tpu.memory_space<vmem>>, vector<4x1xf32>
        %cst_67 = arith.constant 9.99999974E-6 : f32
        %83 = vector.broadcast %cst_67 : f32 to vector<4x1xf32>
        %84 = arith.addf %81, %83 : vector<4x1xf32>
        %85 = math.rsqrt %84 : vector<4x1xf32>
        %86 = arith.mulf %82, %85 : vector<4x1xf32>
        %c0_68 = arith.constant 0 : index
        %c0_69 = arith.constant 0 : index
        %87 = vector.load %arg8[%c0_68, %c0_69] : memref<4x2xf32, #tpu.memory_space<vmem>>, vector<4x1xf32>
        tpu.vector_store %arg8[%c0_68, %c0_69], %86 {strides = array<i32>} : memref<4x2xf32, #tpu.memory_space<vmem>>, vector<4x1xf32>,
        %c0_70 = arith.constant 0 : index
        %c1_71 = arith.constant 1 : index
        %88 = vector.load %arg5[%c0_70, %c1_71] : memref<8x4xf32, #tpu.memory_space<vmem>>, vector<4x1xf32>
        %89 = arith.mulf %75, %86 : vector<4x1xf32>
        %90 = arith.subf %88, %89 : vector<4x1xf32>
        %c0_72 = arith.constant 0 : index
        %c1_73 = arith.constant 1 : index
        %91 = vector.load %arg8[%c0_72, %c1_73] : memref<4x2xf32, #tpu.memory_space<vmem>>, vector<4x1xf32>
        tpu.vector_store %arg8[%c0_72, %c1_73], %90 {strides = array<i32>} : memref<4x2xf32, #tpu.memory_space<vmem>>, vector<4x1xf32>,
      } else {
      }
      %c0_10 = arith.constant 0 : index
      %c0_11 = arith.constant 0 : index
      %19 = vector.load %arg3[%c0_10, %c0_11] : memref<4x8xf32, #tpu.memory_space<vmem>>, vector<4x8xf32>
      %cst = arith.constant dense<0.000000e+00> : vector<4x16xf32>
      %20 = tpu.matmul %19, %1, %cst {dimension_numbers = #tpu.dot_dimension_numbers<[1], [0], [0], [1], [0, 0, 1, 1], [], []>} : vector<4x8xf32>, vector<8x16xf32>, vector<4x16xf32> -> vector<4x16xf32>
      %c0_12 = arith.constant 0 : index
      %c0_13 = arith.constant 0 : index
      %21 = vector.load %arg8[%c0_12, %c0_13] : memref<4x2xf32, #tpu.memory_space<vmem>>, vector<4x1xf32>
      %22 = vector.broadcast %21 : vector<4x1xf32> to vector<4x16xf32>
      %23 = arith.mulf %20, %22 : vector<4x16xf32>
      %c0_14 = arith.constant 0 : index
      %c1 = arith.constant 1 : index
      %24 = vector.load %arg8[%c0_14, %c1] : memref<4x2xf32, #tpu.memory_space<vmem>>, vector<4x1xf32>
      %25 = vector.broadcast %24 : vector<4x1xf32> to vector<4x16xf32>
      %26 = arith.addf %23, %25 : vector<4x16xf32>
      %cst_15 = arith.constant 0.000000e+00 : f32
      %27 = vector.broadcast %cst_15 : f32 to vector<4x16xf32>
      %28 = arith.cmpf oge, %26, %27 : vector<4x16xf32>
      %cst_16 = arith.constant 0.00999999977 : f32
      %29 = vector.broadcast %cst_16 : f32 to vector<4x16xf32>
      %30 = arith.mulf %29, %26 : vector<4x16xf32>
      %31 = arith.select %28, %26, %30 : vector<4x16xi1>, vector<4x16xf32>
      %c0_17 = arith.constant 0 : index
      %c2 = arith.constant 2 : index
      %32 = vector.load %arg7[%c0_17, %c2] : memref<4x20xf32, #tpu.memory_space<vmem>>, vector<4x16xf32>
      tpu.vector_store %arg7[%c0_17, %c2], %31 {strides = array<i32>} : memref<4x20xf32, #tpu.memory_space<vmem>>, vector<4x16xf32>,
      %c0_18 = arith.constant 0 : index
      %c0_19 = arith.constant 0 : index
      %c0_20 = arith.constant 0 : index
      %33 = vector.load %arg4[%c0_18, %c0_19, %c0_20] : memref<5x8x4xf32, #tpu.memory_space<vmem>>, vector<1x8x4xf32>
      %34 = vector.shape_cast %33 : vector<1x8x4xf32> to vector<8x4xf32>
      %c0_21 = arith.constant 0 : index
      %c0_22 = arith.constant 0 : index
      %35 = vector.load %arg7[%c0_21, %c0_22] : memref<4x20xf32, #tpu.memory_space<vmem>>, vector<4x16xf32>
      %cst_23 = arith.constant dense<0.000000e+00> : vector<8x16xf32>
      %36 = tpu.matmul %34, %35, %cst_23 {dimension_numbers = #tpu.dot_dimension_numbers<[1], [0], [0], [1], [0, 0, 1, 1], [], []>} : vector<8x4xf32>, vector<4x16xf32>, vector<8x16xf32> -> vector<8x16xf32>
      %c1_24 = arith.constant 1 : index
      %c0_25 = arith.constant 0 : index
      %c0_26 = arith.constant 0 : index
      %37 = vector.load %arg4[%c1_24, %c0_25, %c0_26] : memref<5x8x4xf32, #tpu.memory_space<vmem>>, vector<1x8x4xf32>
      %38 = vector.shape_cast %37 : vector<1x8x4xf32> to vector<8x4xf32>
      %c0_27 = arith.constant 0 : index
      %c1_28 = arith.constant 1 : index
      %39 = vector.load %arg7[%c0_27, %c1_28] : memref<4x20xf32, #tpu.memory_space<vmem>>, vector<4x16xf32>
      %cst_29 = arith.constant dense<0.000000e+00> : vector<8x16xf32>
      %40 = tpu.matmul %38, %39, %cst_29 {dimension_numbers = #tpu.dot_dimension_numbers<[1], [0], [0], [1], [0, 0, 1, 1], [], []>} : vector<8x4xf32>, vector<4x16xf32>, vector<8x16xf32> -> vector<8x16xf32>
      %41 = arith.addf %36, %40 : vector<8x16xf32>
      %c2_30 = arith.constant 2 : index
      %c0_31 = arith.constant 0 : index
      %c0_32 = arith.constant 0 : index
      %42 = vector.load %arg4[%c2_30, %c0_31, %c0_32] : memref<5x8x4xf32, #tpu.memory_space<vmem>>, vector<1x8x4xf32>
      %43 = vector.shape_cast %42 : vector<1x8x4xf32> to vector<8x4xf32>
      %c0_33 = arith.constant 0 : index
      %c2_34 = arith.constant 2 : index
      %44 = vector.load %arg7[%c0_33, %c2_34] : memref<4x20xf32, #tpu.memory_space<vmem>>, vector<4x16xf32>
      %cst_35 = arith.constant dense<0.000000e+00> : vector<8x16xf32>
      %45 = tpu.matmul %43, %44, %cst_35 {dimension_numbers = #tpu.dot_dimension_numbers<[1], [0], [0], [1], [0, 0, 1, 1], [], []>} : vector<8x4xf32>, vector<4x16xf32>, vector<8x16xf32> -> vector<8x16xf32>
      %46 = arith.addf %41, %45 : vector<8x16xf32>
      %c3 = arith.constant 3 : index
      %c0_36 = arith.constant 0 : index
      %c0_37 = arith.constant 0 : index
      %47 = vector.load %arg4[%c3, %c0_36, %c0_37] : memref<5x8x4xf32, #tpu.memory_space<vmem>>, vector<1x8x4xf32>
      %48 = vector.shape_cast %47 : vector<1x8x4xf32> to vector<8x4xf32>
      %c0_38 = arith.constant 0 : index
      %c3_39 = arith.constant 3 : index
      %49 = vector.load %arg7[%c0_38, %c3_39] : memref<4x20xf32, #tpu.memory_space<vmem>>, vector<4x16xf32>
      %cst_40 = arith.constant dense<0.000000e+00> : vector<8x16xf32>
      %50 = tpu.matmul %48, %49, %cst_40 {dimension_numbers = #tpu.dot_dimension_numbers<[1], [0], [0], [1], [0, 0, 1, 1], [], []>} : vector<8x4xf32>, vector<4x16xf32>, vector<8x16xf32> -> vector<8x16xf32>
      %51 = arith.addf %46, %50 : vector<8x16xf32>
      %c4 = arith.constant 4 : index
      %c0_41 = arith.constant 0 : index
      %c0_42 = arith.constant 0 : index
      %52 = vector.load %arg4[%c4, %c0_41, %c0_42] : memref<5x8x4xf32, #tpu.memory_space<vmem>>, vector<1x8x4xf32>
      %53 = vector.shape_cast %52 : vector<1x8x4xf32> to vector<8x4xf32>
      %c0_43 = arith.constant 0 : index
      %c4_44 = arith.constant 4 : index
      %54 = vector.load %arg7[%c0_43, %c4_44] : memref<4x20xf32, #tpu.memory_space<vmem>>, vector<4x16xf32>
      %cst_45 = arith.constant dense<0.000000e+00> : vector<8x16xf32>
      %55 = tpu.matmul %53, %54, %cst_45 {dimension_numbers = #tpu.dot_dimension_numbers<[1], [0], [0], [1], [0, 0, 1, 1], [], []>} : vector<8x4xf32>, vector<4x16xf32>, vector<8x16xf32> -> vector<8x16xf32>
      %56 = arith.addf %51, %55 : vector<8x16xf32>
      %c0_46 = arith.constant 0 : index
      %c0_47 = arith.constant 0 : index
      %57 = vector.load %arg9[%c0_46, %c0_47] : memref<8x2xf32, #tpu.memory_space<vmem>>, vector<8x1xf32>
      %cst_48 = arith.constant dense<0.000000e+00> : vector<8xf32>
      %58 = vector.multi_reduction <add>, %56, %cst_48 [1] : vector<8x16xf32> to vector<8xf32>
      %59 = vector.shape_cast %58 : vector<8xf32> to vector<8x1xf32>
      %60 = arith.addf %57, %59 : vector<8x1xf32>
      %c0_49 = arith.constant 0 : index
      %c0_50 = arith.constant 0 : index
      %61 = vector.load %arg9[%c0_49, %c0_50] : memref<8x2xf32, #tpu.memory_space<vmem>>, vector<8x1xf32>
      tpu.vector_store %arg9[%c0_49, %c0_50], %60 {strides = array<i32>} : memref<8x2xf32, #tpu.memory_space<vmem>>, vector<8x1xf32>,
      %c0_51 = arith.constant 0 : index
      %c1_52 = arith.constant 1 : index
      %62 = vector.load %arg9[%c0_51, %c1_52] : memref<8x2xf32, #tpu.memory_space<vmem>>, vector<8x1xf32>
      %63 = arith.mulf %56, %56 : vector<8x16xf32>
      %cst_53 = arith.constant dense<0.000000e+00> : vector<8xf32>
      %64 = vector.multi_reduction <add>, %63, %cst_53 [1] : vector<8x16xf32> to vector<8xf32>
      %65 = vector.shape_cast %64 : vector<8xf32> to vector<8x1xf32>
      %66 = arith.addf %62, %65 : vector<8x1xf32>
      %c0_54 = arith.constant 0 : index
      %c1_55 = arith.constant 1 : index
      %67 = vector.load %arg9[%c0_54, %c1_55] : memref<8x2xf32, #tpu.memory_space<vmem>>, vector<8x1xf32>
      tpu.vector_store %arg9[%c0_54, %c1_55], %66 {strides = array<i32>} : memref<8x2xf32, #tpu.memory_space<vmem>>, vector<8x1xf32>,
      %68 = arith.index_cast %arg1 : i32 to index
      %c0_56 = arith.constant 0 : index
      %c0_57 = arith.constant 0 : index
      %69 = vector.load %arg6[%68, %c0_56, %c0_57] : memref<2x8x16xf32, #tpu.memory_space<vmem>>, vector<1x8x16xf32>
      %70 = vector.shape_cast %69 : vector<1x8x16xf32> to vector<8x16xf32>
      %71 = vector.shape_cast %56 : vector<8x16xf32> to vector<1x8x16xf32>
      tpu.vector_store %arg6[%68, %c0_56, %c0_57], %71 {strides = array<i32>} : memref<2x8x16xf32, #tpu.memory_space<vmem>>, vector<1x8x16xf32>,
    } else {
    }
    %c2_i32 = arith.constant 2 : i32
    %13 = arith.cmpi eq, %arg0, %c2_i32 : i32
    %14 = arith.extui %13 : i1 to i32
    %c0_i32_7 = arith.constant 0 : i32
    %15 = arith.cmpi ne, %14, %c0_i32_7 : i32
    scf.if %15 {
      %c0_i32_8 = arith.constant 0 : i32
      %16 = arith.cmpi eq, %arg1, %c0_i32_8 : i32
      %17 = arith.extui %16 : i1 to i32
      %c0_i32_9 = arith.constant 0 : i32
      %18 = arith.cmpi ne, %17, %c0_i32_9 : i32
      scf.if %18 {
        %c0_18 = arith.constant 0 : index
        %c0_19 = arith.constant 0 : index
        %38 = vector.load %arg9[%c0_18, %c0_19] : memref<8x2xf32, #tpu.memory_space<vmem>>, vector<8x1xf32>
        %c0_20 = arith.constant 0 : index
        %c1_21 = arith.constant 1 : index
        %39 = vector.load %arg9[%c0_20, %c1_21] : memref<8x2xf32, #tpu.memory_space<vmem>>, vector<8x1xf32>
        %cst_22 = arith.constant 3.125000e-02 : f32
        %40 = vector.broadcast %cst_22 : f32 to vector<8x1xf32>
        %41 = arith.mulf %38, %40 : vector<8x1xf32>
        %cst_23 = arith.constant 3.125000e-02 : f32
        %42 = vector.broadcast %cst_23 : f32 to vector<8x1xf32>
        %43 = arith.mulf %39, %42 : vector<8x1xf32>
        %44 = arith.mulf %41, %41 : vector<8x1xf32>
        %45 = arith.subf %43, %44 : vector<8x1xf32>
        %cst_24 = arith.constant 0.000000e+00 : f32
        %46 = vector.broadcast %cst_24 : f32 to vector<8x1xf32>
        %47 = arith.maximumf %45, %46 : vector<8x1xf32>
        %c0_25 = arith.constant 0 : index
        %c2 = arith.constant 2 : index
        %48 = vector.load %arg5[%c0_25, %c2] : memref<8x4xf32, #tpu.memory_space<vmem>>, vector<8x1xf32>
        %cst_26 = arith.constant 9.99999974E-6 : f32
        %49 = vector.broadcast %cst_26 : f32 to vector<8x1xf32>
        %50 = arith.addf %47, %49 : vector<8x1xf32>
        %51 = math.rsqrt %50 : vector<8x1xf32>
        %52 = arith.mulf %48, %51 : vector<8x1xf32>
        %c0_27 = arith.constant 0 : index
        %c0_28 = arith.constant 0 : index
        %53 = vector.load %arg9[%c0_27, %c0_28] : memref<8x2xf32, #tpu.memory_space<vmem>>, vector<8x1xf32>
        tpu.vector_store %arg9[%c0_27, %c0_28], %52 {strides = array<i32>} : memref<8x2xf32, #tpu.memory_space<vmem>>, vector<8x1xf32>,
        %c0_29 = arith.constant 0 : index
        %c3 = arith.constant 3 : index
        %54 = vector.load %arg5[%c0_29, %c3] : memref<8x4xf32, #tpu.memory_space<vmem>>, vector<8x1xf32>
        %55 = arith.mulf %41, %52 : vector<8x1xf32>
        %56 = arith.subf %54, %55 : vector<8x1xf32>
        %c0_30 = arith.constant 0 : index
        %c1_31 = arith.constant 1 : index
        %57 = vector.load %arg9[%c0_30, %c1_31] : memref<8x2xf32, #tpu.memory_space<vmem>>, vector<8x1xf32>
        tpu.vector_store %arg9[%c0_30, %c1_31], %56 {strides = array<i32>} : memref<8x2xf32, #tpu.memory_space<vmem>>, vector<8x1xf32>,
      } else {
      }
      %19 = arith.index_cast %arg1 : i32 to index
      %c0_10 = arith.constant 0 : index
      %c0_11 = arith.constant 0 : index
      %20 = vector.load %arg6[%19, %c0_10, %c0_11] : memref<2x8x16xf32, #tpu.memory_space<vmem>>, vector<1x8x16xf32>
      %21 = vector.shape_cast %20 : vector<1x8x16xf32> to vector<8x16xf32>
      %c0_12 = arith.constant 0 : index
      %c0_13 = arith.constant 0 : index
      %22 = vector.load %arg9[%c0_12, %c0_13] : memref<8x2xf32, #tpu.memory_space<vmem>>, vector<8x1xf32>
      %23 = vector.broadcast %22 : vector<8x1xf32> to vector<8x16xf32>
      %24 = arith.mulf %21, %23 : vector<8x16xf32>
      %c0_14 = arith.constant 0 : index
      %c1 = arith.constant 1 : index
      %25 = vector.load %arg9[%c0_14, %c1] : memref<8x2xf32, #tpu.memory_space<vmem>>, vector<8x1xf32>
      %26 = vector.broadcast %25 : vector<8x1xf32> to vector<8x16xf32>
      %27 = arith.addf %24, %26 : vector<8x16xf32>
      %cst = arith.constant 0.000000e+00 : f32
      %28 = vector.broadcast %cst : f32 to vector<8x16xf32>
      %29 = arith.cmpf oge, %27, %28 : vector<8x16xf32>
      %cst_15 = arith.constant 0.00999999977 : f32
      %30 = vector.broadcast %cst_15 : f32 to vector<8x16xf32>
      %31 = arith.mulf %30, %27 : vector<8x16xf32>
      %32 = arith.select %29, %27, %31 : vector<8x16xi1>, vector<8x16xf32>
      %33 = arith.addf %32, %1 : vector<8x16xf32>
      %34 = arith.index_cast %arg1 : i32 to index
      %c0_16 = arith.constant 0 : index
      %c0_17 = arith.constant 0 : index
      %35 = vector.load %arg6[%34, %c0_16, %c0_17] : memref<2x8x16xf32, #tpu.memory_space<vmem>>, vector<1x8x16xf32>
      %36 = vector.shape_cast %35 : vector<1x8x16xf32> to vector<8x16xf32>
      %37 = vector.shape_cast %33 : vector<8x16xf32> to vector<1x8x16xf32>
      tpu.vector_store %arg6[%34, %c0_16, %c0_17], %37 {strides = array<i32>} : memref<2x8x16xf32, #tpu.memory_space<vmem>>, vector<1x8x16xf32>,
    } else {
    }
    return
  }
  func.func @transform_0(%arg0: i32, %arg1: i32) -> (i32, i32, i32) {
    %c0_i32 = arith.constant 0 : i32
    %c0_i32_0 = arith.constant 0 : i32
    %c0_i32_1 = arith.constant 0 : i32
    return %arg1, %c0_i32, %c0_i32_0 : i32, i32, i32
  }
  func.func @transform_1(%arg0: i32, %arg1: i32) -> (i32, i32) {
    %c0_i32 = arith.constant 0 : i32
    %c0_i32_0 = arith.constant 0 : i32
    %c0_i32_1 = arith.constant 0 : i32
    return %c0_i32, %c0_i32_0 : i32, i32
  }
  func.func @transform_2(%arg0: i32, %arg1: i32) -> (i32, i32, i32) {
    %c0_i32 = arith.constant 0 : i32
    %c0_i32_0 = arith.constant 0 : i32
    %c0_i32_1 = arith.constant 0 : i32
    %c0_i32_2 = arith.constant 0 : i32
    return %c0_i32, %c0_i32_0, %c0_i32_1 : i32, i32, i32
  }
  func.func @transform_3(%arg0: i32, %arg1: i32) -> (i32, i32) {
    %c0_i32 = arith.constant 0 : i32
    %c0_i32_0 = arith.constant 0 : i32
    %c0_i32_1 = arith.constant 0 : i32
    return %c0_i32, %c0_i32_0 : i32, i32
  }
  func.func @transform_4(%arg0: i32, %arg1: i32) -> (i32, i32, i32) {
    %c0_i32 = arith.constant 0 : i32
    %c0_i32_0 = arith.constant 0 : i32
    %c0_i32_1 = arith.constant 0 : i32
    %c0_i32_2 = arith.constant 0 : i32
    return %c0_i32, %c0_i32_0, %c0_i32_1 : i32, i32, i32
  }
}

</mosaic_0001>

<llo_original>
// kernel: resblock_pallas.1
$region0: #{resblock_pallas.1}
  #allocation0 [shape = 'u32[]', space=smem, size = 0x4, offset = 0x4, fixed_abs, tag = 'smem constant byte address 0x4 - core index']
  #allocation1 [shape = 'u32[144,128]{1,0:T(1,128)}', space=vmem, size = 0x12000, scoped, tag = 'internal scratch']
  #allocation2 [shape = 'f32[4,20]{1,0:T(4,128)}', space=vmem, size = 0x800, scoped, tag = 'scratch operand']
  #allocation3 [shape = 'f32[4,2]{1,0:T(4,128)}', space=vmem, size = 0x800, scoped, tag = 'scratch operand']
  #allocation4 [shape = 'f32[8,2]{1,0:T(8,128)}', space=vmem, size = 0x1000, scoped, tag = 'scratch operand']
  %s0 = inlined_call_operand.vmem [shape: f32[2,8,16], index: 0, kind: input, shape index: {}]
  %s1 = inlined_call_operand.vmem [shape: f32[4,8], index: 1, kind: input, shape index: {}]
  %s2 = inlined_call_operand.vmem [shape: f32[5,8,4], index: 2, kind: input, shape index: {}]
  %s3 = inlined_call_operand.vmem [shape: f32[8,4], index: 3, kind: input, shape index: {}]
  %s4 = inlined_call_operand.hbm [shape: f32[2,8,16], index: 4, kind: output, shape index: {}]
  %s5 = sld [smem:[#allocation0]]
  $region73: #{resblock_pallas.1} parent=0
    _
  %s7 = ssub.s32 1, %s5
  %s8 = scalar_select 0, %s7, %s5
  $region1: #{resblock_pallas.1} parent=0
    #allocation5 [shape = 'u8[8192]{0}', space=vmem, size = 0x2000, scoped, tag = 'output window, operand 0, single buffered']
    #allocation6 [shape = 's32[2]{0}', space=sflag, size = 0x8, scoped, tag = 'scoped memory for resblock_pallas.1']
    %9 = vsyncpa [#allocation6], 0
    loop: start=0, step=1, limit=8
    $region2: #{resblock_pallas.1} parent=1 // loop_pre_header
      _
    $region3: #{resblock_pallas.1} parent=1 // loop_header
      %s11 = sphi 0, %s15
      %p12 = scmp.ge.s32.totalorder %s11, 8
      %s18 = sphi 0, %s30
      %s19 = sphi 0, %s26
      %s20 = sphi 0, %s18
      %s21 = sphi 0, %s19
      %s22 = sphi 0, %s20
      %s23 = sphi 0, %s21
      %s33 = sphi 0, %s35
      %s36 = sphi 0, %s33
      %s37 = sphi 0, %s36
      %s53 = sphi 0, %s37
      %s57 = sphi 0, %s57
      %s59 = sphi 0, %s57
      %s60 = sphi 0, %s59
      %s74 = sphi 0, %s60
      %s78 = sphi 0, %s78
      %s80 = sphi 0, %s78
      %s81 = sphi 0, %s80
      %s95 = sphi 0, %s81
      %s99 = sphi 0, %s99
      %s101 = sphi 0, %s99
      %s102 = sphi 0, %s101
      %s116 = sphi 0, %s102
      %s120 = sphi 0, %s120
      %s122 = sphi 0, %s120
      %s123 = sphi 0, %s122
      %s137 = sphi 0, %s123
    $region4: #{resblock_pallas.1} parent=1 // loop_header_branch
      %14 = sbr.rel (%p12) target = $region8
    $region5: #{resblock_pallas.1} parent=1 // loop_body
      %s16 = ssub.s32 %s11, 1
      %s17 = ssub.s32 %s11, 2
      %s24 = sadd.s32 1, %s19
      %p25 = scmp.ge.s32.totalorder %s24, 2
      %s26 = scalar_select %p25, 0, %s24
      %s27 = sadd.s32 1, %s18
      %s28 = scalar_select %p25, %s27, %s18
      %p29 = scmp.ge.s32.totalorder %s28, 3
      %s30 = scalar_select %p29, 0, %s28
      %s31 = ssub.s32 %s19, %s26
      %p32 = scmp.eq.s32.totalorder %s31, 0
      %s34 = sadd.s32 %s33, 1
      %s35 = scalar_select %p32, %s33, %s34
      %p38 = pneg %p32
      %p39 = scmp.eq.s32.totalorder %s11, 5
      %p40 = por %p38, %p39
      %p41 = scmp.ne.s32.totalorder %s33, %s36
      %p42 = scmp.eq.s32.totalorder %s11, 0
      %p43 = por %p41, %p42
      %p44 = scmp.ne.s32.totalorder %s33, %s36
      %p45 = scmp.eq.s32.totalorder %s16, 5
      %p46 = por %p44, %p45
      %p47 = scmp.ne.s32.totalorder %s36, %s37
      %p48 = scmp.eq.s32.totalorder %s16, 0
      %p49 = por %p47, %p48
      %p50 = scmp.ne.s32.totalorder %s36, %s37
      %p51 = scmp.eq.s32.totalorder %s17, 5
      %p52 = por %p50, %p51
      %p54 = scmp.ne.s32.totalorder %s37, %s53
      %p55 = scmp.eq.s32.totalorder %s17, 0
      %p56 = por %p54, %p55
      %s58 = sadd.s32 %s57, 1
      %p61 = scmp.eq.s32.totalorder %s11, 5
      %p62 = scmp.ne.s32.totalorder %s57, %s59
      %p63 = scmp.eq.s32.totalorder %s11, 0
      %p64 = por %p62, %p63
      %p65 = scmp.ne.s32.totalorder %s57, %s59
      %p66 = scmp.eq.s32.totalorder %s16, 5
      %p67 = por %p65, %p66
      %p68 = scmp.ne.s32.totalorder %s59, %s60
      %p69 = scmp.eq.s32.totalorder %s16, 0
      %p70 = por %p68, %p69
      %p71 = scmp.ne.s32.totalorder %s59, %s60
      %p72 = scmp.eq.s32.totalorder %s17, 5
      %p73 = por %p71, %p72
      %p75 = scmp.ne.s32.totalorder %s60, %s74
      %p76 = scmp.eq.s32.totalorder %s17, 0
      %p77 = por %p75, %p76
      %s79 = sadd.s32 %s78, 1
      %p82 = scmp.eq.s32.totalorder %s11, 5
      %p83 = scmp.ne.s32.totalorder %s78, %s80
      %p84 = scmp.eq.s32.totalorder %s11, 0
      %p85 = por %p83, %p84
      %p86 = scmp.ne.s32.totalorder %s78, %s80
      %p87 = scmp.eq.s32.totalorder %s16, 5
      %p88 = por %p86, %p87
      %p89 = scmp.ne.s32.totalorder %s80, %s81
      %p90 = scmp.eq.s32.totalorder %s16, 0
      %p91 = por %p89, %p90
      %p92 = scmp.ne.s32.totalorder %s80, %s81
      %p93 = scmp.eq.s32.totalorder %s17, 5
      %p94 = por %p92, %p93
      %p96 = scmp.ne.s32.totalorder %s81, %s95
      %p97 = scmp.eq.s32.totalorder %s17, 0
      %p98 = por %p96, %p97
      %s100 = sadd.s32 %s99, 1
      %p103 = scmp.eq.s32.totalorder %s11, 5
      %p104 = scmp.ne.s32.totalorder %s99, %s101
      %p105 = scmp.eq.s32.totalorder %s11, 0
      %p106 = por %p104, %p105
      %p107 = scmp.ne.s32.totalorder %s99, %s101
      %p108 = scmp.eq.s32.totalorder %s16, 5
      %p109 = por %p107, %p108
      %p110 = scmp.ne.s32.totalorder %s101, %s102
      %p111 = scmp.eq.s32.totalorder %s16, 0
      %p112 = por %p110, %p111
      %p113 = scmp.ne.s32.totalorder %s101, %s102
      %p114 = scmp.eq.s32.totalorder %s17, 5
      %p115 = por %p113, %p114
      %p117 = scmp.ne.s32.totalorder %s102, %s116
      %p118 = scmp.eq.s32.totalorder %s17, 0
      %p119 = por %p117, %p118
      %s121 = sadd.s32 %s120, 1
      %p124 = scmp.eq.s32.totalorder %s11, 5
      %p125 = scmp.ne.s32.totalorder %s120, %s122
      %p126 = scmp.eq.s32.totalorder %s11, 0
      %p127 = por %p125, %p126
      %p128 = scmp.ne.s32.totalorder %s120, %s122
      %p129 = scmp.eq.s32.totalorder %s16, 5
      %p130 = por %p128, %p129
      %p131 = scmp.ne.s32.totalorder %s122, %s123
      %p132 = scmp.eq.s32.totalorder %s16, 0
      %p133 = por %p131, %p132
      %p134 = scmp.ne.s32.totalorder %s122, %s123
      %p135 = scmp.eq.s32.totalorder %s17, 5
      %p136 = por %p134, %p135
      %p138 = scmp.ne.s32.totalorder %s123, %s137
      %p139 = scmp.eq.s32.totalorder %s17, 0
      %p140 = por %p138, %p139
      %p141 = scmp.le.s32.totalorder 1, %s11
      %p142 = scmp.lt.s32.totalorder %s11, 7
      %p143 = pnand %p141, %p142
      %p144 = pneg %p143
      // Predicated region
      $region9: #{resblock_pallas.1} parent=5 // pred_check
        _
      $region10: #{resblock_pallas.1} parent=5 // pred_check_branch
        %146 = sbr.rel (%p143) target = $region12
      $region11: #{resblock_pallas.1} parent=5 // pred_region
        %s147 = ssub.s32 %s11, 1
        // Predicated region
        $region13: #{resblock_pallas.1} parent=11 // pred_check
          %p148 = pneg %p70
        $region14: #{resblock_pallas.1} parent=11 // pred_check_branch
          %150 = sbr.rel (%p148) target = $region16
        $region15: #{resblock_pallas.1} parent=11 // pred_region
          _
        $region16: #{resblock_pallas.1} parent=11 // pred_fallthru
          _
        // Predicated region
        $region17: #{resblock_pallas.1} parent=11 // pred_check
          %p151 = pneg %p91
        $region18: #{resblock_pallas.1} parent=11 // pred_check_branch
          %153 = sbr.rel (%p151) target = $region20
        $region19: #{resblock_pallas.1} parent=11 // pred_region
          _
        $region20: #{resblock_pallas.1} parent=11 // pred_fallthru
          _
        // Predicated region
        $region21: #{resblock_pallas.1} parent=11 // pred_check
          %p154 = pneg %p112
        $region22: #{resblock_pallas.1} parent=11 // pred_check_branch
          %156 = sbr.rel (%p154) target = $region24
        $region23: #{resblock_pallas.1} parent=11 // pred_region
          _
        $region24: #{resblock_pallas.1} parent=11 // pred_fallthru
          _
      $region12: #{resblock_pallas.1} parent=5 // pred_fallthru
        _
      %p157 = scmp.lt.s32.totalorder %s11, 6
      // Predicated region
      $region25: #{resblock_pallas.1} parent=5 // pred_check
        %p158 = pneg %p157
      $region26: #{resblock_pallas.1} parent=5 // pred_check_branch
        %160 = sbr.rel (%p158) target = $region28
      $region27: #{resblock_pallas.1} parent=5 // pred_region
        // Predicated region
        $region29: #{resblock_pallas.1} parent=27 // pred_check
          %p161 = pneg %p43
        $region30: #{resblock_pallas.1} parent=27 // pred_check_branch
          %163 = sbr.rel (%p161) target = $region32
        $region31: #{resblock_pallas.1} parent=27 // pred_region
          %p164 = scmp.lt.s32.totalorder %s19, 1
          %s165 = scalar_select %p164, %s19, 1
          %s166 = smul.addr %s165, 8
          %s167 = scalar_lea.vmem %s0, %s166
        $region32: #{resblock_pallas.1} parent=27 // pred_fallthru
          _
      $region28: #{resblock_pallas.1} parent=5 // pred_fallthru
        _
      %p168 = scmp.le.s32.totalorder 1, %s11
      %p169 = scmp.lt.s32.totalorder %s11, 7
      %p170 = pnand %p168, %p169
      %p171 = pneg %p170
      // Predicated region
      $region33: #{resblock_pallas.1} parent=5 // pred_check
        _
      $region34: #{resblock_pallas.1} parent=5 // pred_check_branch
        %173 = sbr.rel (%p170) target = $region36
      $region35: #{resblock_pallas.1} parent=5 // pred_region
        %s174 = ssub.s32 %s11, 1
        %p175 = scmp.lt.s32.totalorder %s21, 1
        %s176 = scalar_select %p175, %s21, 1
        %s177 = smul.addr %s176, 8
        %s178 = scalar_lea.vmem %s0, %s177
        %p179 = pneg %p49
        %p180 = pneg %p46
        %p181 = pneg %p70
        %p182 = pneg %p67
        %p183 = pneg %p91
        %p184 = pneg %p88
        %p185 = pneg %p112
        %p186 = pneg %p109
        %p187 = pneg %p133
        %p188 = pneg %p130
        %p189 = scmp.lt.s32.totalorder %s21, 1
        %s190 = scalar_select %p189, %s21, 1
        %s191 = smul.addr %s190, 8
        %s192 = scalar_lea.vmem %s0, %s191
        %v193 = vld [vmem:[%s192] sm:$0xff]
        %p194 = scmp.eq.s32.totalorder %s20, 0
        %p195 = scmp.eq.s32.totalorder %s21, 0
        %p196 = pnand %p194, %p195
        %p197 = pneg %p196
        // Predicated region
        $region37: #{resblock_pallas.1} parent=35 // pred_check
          _
        $region38: #{resblock_pallas.1} parent=35 // pred_check_branch
          %199 = sbr.rel (%p196) target = $region40
        $region39: #{resblock_pallas.1} parent=35 // pred_region
          %vm200 = vcmask 11264
          %201 = vst.msk [vmem:[#allocation3] sm:$0xf] %vm200, 0.0
          %vm202 = vcmask 15360
          %203 = vst.msk [vmem:[#allocation4] sm:$0xff] %vm202, 0.0
          %vm204 = vcmask 158720
          %205 = vst.msk [vmem:[#allocation2] sm:$0xf] %vm204, 0.0
        $region40: #{resblock_pallas.1} parent=35 // pred_fallthru
          _
        // Predicated region
        $region41: #{resblock_pallas.1} parent=35 // pred_check
          %p206 = pneg %p194
        $region42: #{resblock_pallas.1} parent=35 // pred_check_branch
          %208 = sbr.rel (%p206) target = $region44
        $region43: #{resblock_pallas.1} parent=35 // pred_region
          %v209 = vld [vmem:[%s1] sm:$0xf]
          %vm210 = vcmask 64512
          %v212 = vsel %vm210, %v209, 0
          %214 = vmatprep.subr.mxu0 0.0
          %215 = vmatpush1.msra.mxu0 0.0
          %216 = vmatprep.subr.mxu0 0.0
          %217 = vmatpush1.msra.mxu0 0.0
          %218 = vmatprep.subr.mxu0 0.0
          %219 = vmatpush1.msra.mxu0 0.0
          %220 = vmatprep.subr.mxu0 0.0
          %221 = vmatpush1.msra.mxu0 0.0
          %222 = vmatprep.subr.mxu0 0.0
          %223 = vmatpush1.msra.mxu0 0.0
          %224 = vmatprep.subr.mxu0 0.0
          %225 = vmatpush1.msra.mxu0 0.0
          %226 = vmatprep.subr.mxu0 0.0
          %227 = vmatpush1.msra.mxu0 0.0
          %228 = vmatprep.subr.mxu0 0.0
          %229 = vmatpush1.msra.mxu0 0.0
          %230 = vmatprep.subr.mxu0 0.0
          %231 = vmatpush1.msra.mxu0 0.0
          %232 = vmatprep.subr.mxu0 0.0
          %233 = vmatpush1.msra.mxu0 0.0
          %234 = vmatprep.subr.mxu0 0.0
          %235 = vmatpush1.msra.mxu0 0.0
          %236 = vmatprep.subr.mxu0 0.0
          %237 = vmatpush1.msra.mxu0 0.0
          %238 = vmatprep.subr.mxu0 0.0
          %239 = vmatpush1.msra.mxu0 0.0
          %240 = vmatprep.subr.mxu0 0.0
          %241 = vmatpush1.msra.mxu0 0.0
          %242 = vmatprep.subr.mxu0 0.0
          %243 = vmatpush1.msra.mxu0 0.0
          %244 = vmatprep.subr.mxu0 0.0
          %245 = vmatpush1.msra.mxu0 %v193
          %246 = vmatprep.subr.mxu0 0.0
          %247 = vmatpush2.msra.mxu0 0.0
          %248 = vmatprep.subr.mxu0 0.0
          %249 = vmatpush2.msra.mxu0 0.0
          %250 = vmatprep.subr.mxu0 0.0
          %251 = vmatpush2.msra.mxu0 0.0
          %252 = vmatprep.subr.mxu0 0.0
          %253 = vmatpush2.msra.mxu0 0.0
          %254 = vmatprep.subr.mxu0 0.0
          %255 = vmatpush2.msra.mxu0 0.0
          %256 = vmatprep.subr.mxu0 0.0
          %257 = vmatpush2.msra.mxu0 0.0
          %258 = vmatprep.subr.mxu0 0.0
          %259 = vmatpush2.msra.mxu0 0.0
          %260 = vmatprep.subr.mxu0 0.0
          %261 = vmatpush2.msra.mxu0 0.0
          %262 = vmatprep.subr.mxu0 0.0
          %263 = vmatpush2.msra.mxu0 0.0
          %264 = vmatprep.subr.mxu0 0.0
          %265 = vmatpush2.msra.mxu0 0.0
          %266 = vmatprep.subr.mxu0 0.0
          %267 = vmatpush2.msra.mxu0 0.0
          %268 = vmatprep.subr.mxu0 0.0
          %269 = vmatpush2.msra.mxu0 0.0
          %270 = vmatprep.subr.mxu0 0.0
          %271 = vmatpush2.msra.mxu0 0.0
          %272 = vmatprep.subr.mxu0 0.0
          %273 = vmatpush2.msra.mxu0 0.0
          %274 = vmatprep.subr.mxu0 0.0
          %275 = vmatpush2.msra.mxu0 0.0
          %276 = vmatprep.subr.mxu0 0.0
          %277 = vmatpush2.msra.mxu0 0.0
          %278 = vmatprep.mubr.f32.mxu0 0.0
          %279 = vmatmul.mubr.f32.gmra.mxu0 %v212
          %v280 = vpop.f32.mrf.mxu0
          %v281 = vadd.f32 0.0, %v280
          %v282 = vpop.f32.mrf.mxu0
          %283 = vdwg.mxu0
          %v284 = vld [vmem:[#allocation3] sm:$0xf]
          %vm285 = vcmask 125952
          %v286 = vsel %vm285, %v281, 0.0
          %287 = vadd.xlane.f32.xlu0 %v286
          %v288 = vpop.xlane.xlu0 %287
          %v289 = vadd.f32 %v284, %v288
          %vm290 = vcmask 3072
          %291 = vst.msk [vmem:[#allocation3] sm:$0xf] %vm290, %v289
          %v292 = vld [vmem:[#allocation3] sm:$0xf]
          %v293 = vmul.f32 %v281, %v281
          %v294 = vsel %vm285, %v293, 0.0
          %295 = vadd.xlane.f32.xlu0 %v294
          %v296 = vpop.xlane.xlu0 %295
          %v297 = vadd.f32 %v292, %v296
          %vm298 = vcmask 11272
          %299 = vst.msk [vmem:[#allocation3] sm:$0xf] %vm298, %v297
        $region44: #{resblock_pallas.1} parent=35 // pred_fallthru
          _
        %p300 = scmp.eq.s32.totalorder %s20, 1
        // Predicated region
        $region45: #{resblock_pallas.1} parent=35 // pred_check
          %p301 = pneg %p300
        $region46: #{resblock_pallas.1} parent=35 // pred_check_branch
          %303 = sbr.rel (%p301) target = $region48
        $region47: #{resblock_pallas.1} parent=35 // pred_region
          // Predicated region
          $region49: #{resblock_pallas.1} parent=47 // pred_check
            %p304 = pneg %p195
          $region50: #{resblock_pallas.1} parent=47 // pred_check_branch
            %306 = sbr.rel (%p304) target = $region52
          $region51: #{resblock_pallas.1} parent=47 // pred_region
            %v307 = vld [vmem:[#allocation3] sm:$0xf]
            %v308 = vmul.f32 %v307, 0.03125
            %v309 = vmul.f32 %v308, %v308
            %311 = vrot.lane.b32.xlu0 %v309, 1
            %v312 = vpop.permute.xlu0 %311
            %v314 = vsub.f32 %v308, %v312
            %v315 = vmax.f32 %v314, 0.0
            %v316 = vld [vmem:[%s3] sm:$0xf]
            %v317 = vadd.f32 %v315, 1e-05
            %v318 = vrsqrt.pop %v317
            %320 = vrot.lane.b32.xlu0 %v318, 127
            %v321 = vpop.permute.xlu0 %320
            %v323 = vmul.f32 %v316, %v321
            %vm324 = vcmask 3072
            %325 = vst.msk [vmem:[#allocation3] sm:$0xf] %vm324, %v323
            %v326 = vld [vmem:[%s3] sm:$0xf]
            %v327 = vmul.f32 %v308, %v323
            %329 = vrot.lane.b32.xlu0 %v327, 1
            %v330 = vpop.permute.xlu0 %329
            %v332 = vsub.f32 %v326, %v330
            %vm333 = vcmask 11272
            %334 = vst.msk [vmem:[#allocation3] sm:$0xf] %vm333, %v332
          $region52: #{resblock_pallas.1} parent=47 // pred_fallthru
            _
          %v335 = vld [vmem:[%s1] sm:$0xf]
          %vm336 = vcmask 64512
          %v338 = vsel %vm336, %v335, 0
          %340 = vmatprep.subr.mxu0 0.0
          %341 = vmatpush1.msra.mxu0 0.0
          %342 = vmatprep.subr.mxu0 0.0
          %343 = vmatpush1.msra.mxu0 0.0
          %344 = vmatprep.subr.mxu0 0.0
          %345 = vmatpush1.msra.mxu0 0.0
          %346 = vmatprep.subr.mxu0 0.0
          %347 = vmatpush1.msra.mxu0 0.0
          %348 = vmatprep.subr.mxu0 0.0
          %349 = vmatpush1.msra.mxu0 0.0
          %350 = vmatprep.subr.mxu0 0.0
          %351 = vmatpush1.msra.mxu0 0.0
          %352 = vmatprep.subr.mxu0 0.0
          %353 = vmatpush1.msra.mxu0 0.0
          %354 = vmatprep.subr.mxu0 0.0
          %355 = vmatpush1.msra.mxu0 0.0
          %356 = vmatprep.subr.mxu0 0.0
          %357 = vmatpush1.msra.mxu0 0.0
          %358 = vmatprep.subr.mxu0 0.0
          %359 = vmatpush1.msra.mxu0 0.0
          %360 = vmatprep.subr.mxu0 0.0
          %361 = vmatpush1.msra.mxu0 0.0
          %362 = vmatprep.subr.mxu0 0.0
          %363 = vmatpush1.msra.mxu0 0.0
          %364 = vmatprep.subr.mxu0 0.0
          %365 = vmatpush1.msra.mxu0 0.0
          %366 = vmatprep.subr.mxu0 0.0
          %367 = vmatpush1.msra.mxu0 0.0
          %368 = vmatprep.subr.mxu0 0.0
          %369 = vmatpush1.msra.mxu0 0.0
          %370 = vmatprep.subr.mxu0 0.0
          %371 = vmatpush1.msra.mxu0 %v193
          %372 = vmatprep.subr.mxu0 0.0
          %373 = vmatpush2.msra.mxu0 0.0
          %374 = vmatprep.subr.mxu0 0.0
          %375 = vmatpush2.msra.mxu0 0.0
          %376 = vmatprep.subr.mxu0 0.0
          %377 = vmatpush2.msra.mxu0 0.0
          %378 = vmatprep.subr.mxu0 0.0
          %379 = vmatpush2.msra.mxu0 0.0
          %380 = vmatprep.subr.mxu0 0.0
          %381 = vmatpush2.msra.mxu0 0.0
          %382 = vmatprep.subr.mxu0 0.0
          %383 = vmatpush2.msra.mxu0 0.0
          %384 = vmatprep.subr.mxu0 0.0
          %385 = vmatpush2.msra.mxu0 0.0
          %386 = vmatprep.subr.mxu0 0.0
          %387 = vmatpush2.msra.mxu0 0.0
          %388 = vmatprep.subr.mxu0 0.0
          %389 = vmatpush2.msra.mxu0 0.0
          %390 = vmatprep.subr.mxu0 0.0
          %391 = vmatpush2.msra.mxu0 0.0
          %392 = vmatprep.subr.mxu0 0.0
          %393 = vmatpush2.msra.mxu0 0.0
          %394 = vmatprep.subr.mxu0 0.0
          %395 = vmatpush2.msra.mxu0 0.0
          %396 = vmatprep.subr.mxu0 0.0
          %397 = vmatpush2.msra.mxu0 0.0
          %398 = vmatprep.subr.mxu0 0.0
          %399 = vmatpush2.msra.mxu0 0.0
          %400 = vmatprep.subr.mxu0 0.0
          %401 = vmatpush2.msra.mxu0 0.0
          %402 = vmatprep.subr.mxu0 0.0
          %403 = vmatpush2.msra.mxu0 0.0
          %404 = vmatprep.mubr.f32.mxu0 0.0
          %405 = vmatmul.mubr.f32.gmra.mxu0 %v338
          %v406 = vpop.f32.mrf.mxu0
          %v407 = vadd.f32 0.0, %v406
          %v408 = vpop.f32.mrf.mxu0
          %409 = vdwg.mxu0
          %v410 = vld [vmem:[#allocation3] sm:$0xf]
          %412 = vset.pattern.permute.xlu0 0
          %413 = vperm.xlu0 %412, %v410
          %v414 = vpop.permute.xlu0 %413
          %v416 = vmul.f32 %v407, %v414
          %417 = vset.pattern.permute.xlu0 1
          %418 = vperm.xlu0 %417, %v410
          %v419 = vpop.permute.xlu0 %418
          %v421 = vadd.f32 %v416, %v419
          %vm422 = vcmp.ge.f32.partialorder %v421, 0.0
          %v423 = vmul.f32 %v421, 0.01
          %v424 = vsel %vm422, %v421, %v423
          %426 = vrot.lane.b32.xlu0 %v424, 2
          %v427 = vpop.permute.xlu0 %426
          %vm429 = vcmask 142352
          %430 = vst.msk [vmem:[#allocation2] sm:$0xf] %vm429, %v427
          %v431 = vld [vmem:[%s2] sm:$0xff]
          %v432 = vld [vmem:[#allocation2] sm:$0xf]
          %s433 = scalar_lea.vmem %s2, 8
          %v434 = vld [vmem:[%s433] sm:$0xff]
          %436 = vrot.lane.b32.xlu0 %v432, 127
          %v437 = vpop.permute.xlu0 %436
          %vm438 = vcmask 31744
          %v440 = vsel %vm438, %v434, 0
          %vm442 = vcmask 1043456
          %v443 = vsel %vm442, %v437, 0
          %445 = vmatprep.subr.mxu0 0.0
          %446 = vmatpush1.msra.mxu0 0.0
          %447 = vmatprep.subr.mxu0 0.0
          %448 = vmatpush1.msra.mxu0 0.0
          %449 = vmatprep.subr.mxu0 0.0
          %450 = vmatpush1.msra.mxu0 0.0
          %451 = vmatprep.subr.mxu0 0.0
          %452 = vmatpush1.msra.mxu0 0.0
          %453 = vmatprep.subr.mxu0 0.0
          %454 = vmatpush1.msra.mxu0 0.0
          %455 = vmatprep.subr.mxu0 0.0
          %456 = vmatpush1.msra.mxu0 0.0
          %457 = vmatprep.subr.mxu0 0.0
          %458 = vmatpush1.msra.mxu0 0.0
          %459 = vmatprep.subr.mxu0 0.0
          %460 = vmatpush1.msra.mxu0 0.0
          %461 = vmatprep.subr.mxu0 0.0
          %462 = vmatpush1.msra.mxu0 0.0
          %463 = vmatprep.subr.mxu0 0.0
          %464 = vmatpush1.msra.mxu0 0.0
          %465 = vmatprep.subr.mxu0 0.0
          %466 = vmatpush1.msra.mxu0 0.0
          %467 = vmatprep.subr.mxu0 0.0
          %468 = vmatpush1.msra.mxu0 0.0
          %469 = vmatprep.subr.mxu0 0.0
          %470 = vmatpush1.msra.mxu0 0.0
          %471 = vmatprep.subr.mxu0 0.0
          %472 = vmatpush1.msra.mxu0 0.0
          %473 = vmatprep.subr.mxu0 0.0
          %474 = vmatpush1.msra.mxu0 0.0
          %475 = vmatprep.subr.mxu0 0.0
          %476 = vmatpush1.msra.mxu0 %v443
          %477 = vmatprep.subr.mxu0 0.0
          %478 = vmatpush2.msra.mxu0 0.0
          %479 = vmatprep.subr.mxu0 0.0
          %480 = vmatpush2.msra.mxu0 0.0
          %481 = vmatprep.subr.mxu0 0.0
          %482 = vmatpush2.msra.mxu0 0.0
          %483 = vmatprep.subr.mxu0 0.0
          %484 = vmatpush2.msra.mxu0 0.0
          %485 = vmatprep.subr.mxu0 0.0
          %486 = vmatpush2.msra.mxu0 0.0
          %487 = vmatprep.subr.mxu0 0.0
          %488 = vmatpush2.msra.mxu0 0.0
          %489 = vmatprep.subr.mxu0 0.0
          %490 = vmatpush2.msra.mxu0 0.0
          %491 = vmatprep.subr.mxu0 0.0
          %492 = vmatpush2.msra.mxu0 0.0
          %493 = vmatprep.subr.mxu0 0.0
          %494 = vmatpush2.msra.mxu0 0.0
          %495 = vmatprep.subr.mxu0 0.0
          %496 = vmatpush2.msra.mxu0 0.0
          %497 = vmatprep.subr.mxu0 0.0
          %498 = vmatpush2.msra.mxu0 0.0
          %499 = vmatprep.subr.mxu0 0.0
          %500 = vmatpush2.msra.mxu0 0.0
          %501 = vmatprep.subr.mxu0 0.0
          %502 = vmatpush2.msra.mxu0 0.0
          %503 = vmatprep.subr.mxu0 0.0
          %504 = vmatpush2.msra.mxu0 0.0
          %505 = vmatprep.subr.mxu0 0.0
          %506 = vmatpush2.msra.mxu0 0.0
          %507 = vmatprep.subr.mxu0 0.0
          %508 = vmatpush2.msra.mxu0 0.0
          %509 = vmatprep.mubr.f32.mxu0 0.0
          %510 = vmatmul.mubr.f32.gmra.mxu0 %v440
          %v511 = vpop.f32.mrf.mxu0
          %v512 = vadd.f32 0.0, %v511
          %v513 = vpop.f32.mrf.mxu0
          %514 = vdwg.mxu0
          %v516 = vsel %vm438, %v431, 0
          %v518 = vsel %vm442, %v432, 0
          %520 = vmatprep.subr.mxu0 0.0
          %521 = vmatpush1.msra.mxu0 0.0
          %522 = vmatprep.subr.mxu0 0.0
          %523 = vmatpush1.msra.mxu0 0.0
          %524 = vmatprep.subr.mxu0 0.0
          %525 = vmatpush1.msra.mxu0 0.0
          %526 = vmatprep.subr.mxu0 0.0
          %527 = vmatpush1.msra.mxu0 0.0
          %528 = vmatprep.subr.mxu0 0.0
          %529 = vmatpush1.msra.mxu0 0.0
          %530 = vmatprep.subr.mxu0 0.0
          %531 = vmatpush1.msra.mxu0 0.0
          %532 = vmatprep.subr.mxu0 0.0
          %533 = vmatpush1.msra.mxu0 0.0
          %534 = vmatprep.subr.mxu0 0.0
          %535 = vmatpush1.msra.mxu0 0.0
          %536 = vmatprep.subr.mxu0 0.0
          %537 = vmatpush1.msra.mxu0 0.0
          %538 = vmatprep.subr.mxu0 0.0
          %539 = vmatpush1.msra.mxu0 0.0
          %540 = vmatprep.subr.mxu0 0.0
          %541 = vmatpush1.msra.mxu0 0.0
          %542 = vmatprep.subr.mxu0 0.0
          %543 = vmatpush1.msra.mxu0 0.0
          %544 = vmatprep.subr.mxu0 0.0
          %545 = vmatpush1.msra.mxu0 0.0
          %546 = vmatprep.subr.mxu0 0.0
          %547 = vmatpush1.msra.mxu0 0.0
          %548 = vmatprep.subr.mxu0 0.0
          %549 = vmatpush1.msra.mxu0 0.0
          %550 = vmatprep.subr.mxu0 0.0
          %551 = vmatpush1.msra.mxu0 %v518
          %552 = vmatprep.subr.mxu0 0.0
          %553 = vmatpush2.msra.mxu0 0.0
          %554 = vmatprep.subr.mxu0 0.0
          %555 = vmatpush2.msra.mxu0 0.0
          %556 = vmatprep.subr.mxu0 0.0
          %557 = vmatpush2.msra.mxu0 0.0
          %558 = vmatprep.subr.mxu0 0.0
          %559 = vmatpush2.msra.mxu0 0.0
          %560 = vmatprep.subr.mxu0 0.0
          %561 = vmatpush2.msra.mxu0 0.0
          %562 = vmatprep.subr.mxu0 0.0
          %563 = vmatpush2.msra.mxu0 0.0
          %564 = vmatprep.subr.mxu0 0.0
          %565 = vmatpush2.msra.mxu0 0.0
          %566 = vmatprep.subr.mxu0 0.0
          %567 = vmatpush2.msra.mxu0 0.0
          %568 = vmatprep.subr.mxu0 0.0
          %569 = vmatpush2.msra.mxu0 0.0
          %570 = vmatprep.subr.mxu0 0.0
          %571 = vmatpush2.msra.mxu0 0.0
          %572 = vmatprep.subr.mxu0 0.0
          %573 = vmatpush2.msra.mxu0 0.0
          %574 = vmatprep.subr.mxu0 0.0
          %575 = vmatpush2.msra.mxu0 0.0
          %576 = vmatprep.subr.mxu0 0.0
          %577 = vmatpush2.msra.mxu0 0.0
          %578 = vmatprep.subr.mxu0 0.0
          %579 = vmatpush2.msra.mxu0 0.0
          %580 = vmatprep.subr.mxu0 0.0
          %581 = vmatpush2.msra.mxu0 0.0
          %582 = vmatprep.subr.mxu0 0.0
          %583 = vmatpush2.msra.mxu0 0.0
          %584 = vmatprep.mubr.f32.mxu0 0.0
          %585 = vmatmul.mubr.f32.gmra.mxu0 %v516
          %v586 = vpop.f32.mrf.mxu0
          %v587 = vadd.f32 %v512, %v586
          %v588 = vpop.f32.mrf.mxu0
          %589 = vdwg.mxu0
          %s590 = scalar_lea.vmem %s2, 16
          %v591 = vld [vmem:[%s590] sm:$0xff]
          %592 = vrot.lane.b32.xlu0 %v432, 126
          %v593 = vpop.permute.xlu0 %592
          %v595 = vsel %vm438, %v591, 0
          %v597 = vsel %vm442, %v593, 0
          %599 = vmatprep.subr.mxu0 0.0
          %600 = vmatpush1.msra.mxu0 0.0
          %601 = vmatprep.subr.mxu0 0.0
          %602 = vmatpush1.msra.mxu0 0.0
          %603 = vmatprep.subr.mxu0 0.0
          %604 = vmatpush1.msra.mxu0 0.0
          %605 = vmatprep.subr.mxu0 0.0
          %606 = vmatpush1.msra.mxu0 0.0
          %607 = vmatprep.subr.mxu0 0.0
          %608 = vmatpush1.msra.mxu0 0.0
          %609 = vmatprep.subr.mxu0 0.0
          %610 = vmatpush1.msra.mxu0 0.0
          %611 = vmatprep.subr.mxu0 0.0
          %612 = vmatpush1.msra.mxu0 0.0
          %613 = vmatprep.subr.mxu0 0.0
          %614 = vmatpush1.msra.mxu0 0.0
          %615 = vmatprep.subr.mxu0 0.0
          %616 = vmatpush1.msra.mxu0 0.0
          %617 = vmatprep.subr.mxu0 0.0
          %618 = vmatpush1.msra.mxu0 0.0
          %619 = vmatprep.subr.mxu0 0.0
          %620 = vmatpush1.msra.mxu0 0.0
          %621 = vmatprep.subr.mxu0 0.0
          %622 = vmatpush1.msra.mxu0 0.0
          %623 = vmatprep.subr.mxu0 0.0
          %624 = vmatpush1.msra.mxu0 0.0
          %625 = vmatprep.subr.mxu0 0.0
          %626 = vmatpush1.msra.mxu0 0.0
          %627 = vmatprep.subr.mxu0 0.0
          %628 = vmatpush1.msra.mxu0 0.0
          %629 = vmatprep.subr.mxu0 0.0
          %630 = vmatpush1.msra.mxu0 %v597
          %631 = vmatprep.subr.mxu0 0.0
          %632 = vmatpush2.msra.mxu0 0.0
          %633 = vmatprep.subr.mxu0 0.0
          %634 = vmatpush2.msra.mxu0 0.0
          %635 = vmatprep.subr.mxu0 0.0
          %636 = vmatpush2.msra.mxu0 0.0
          %637 = vmatprep.subr.mxu0 0.0
          %638 = vmatpush2.msra.mxu0 0.0
          %639 = vmatprep.subr.mxu0 0.0
          %640 = vmatpush2.msra.mxu0 0.0
          %641 = vmatprep.subr.mxu0 0.0
          %642 = vmatpush2.msra.mxu0 0.0
          %643 = vmatprep.subr.mxu0 0.0
          %644 = vmatpush2.msra.mxu0 0.0
          %645 = vmatprep.subr.mxu0 0.0
          %646 = vmatpush2.msra.mxu0 0.0
          %647 = vmatprep.subr.mxu0 0.0
          %648 = vmatpush2.msra.mxu0 0.0
          %649 = vmatprep.subr.mxu0 0.0
          %650 = vmatpush2.msra.mxu0 0.0
          %651 = vmatprep.subr.mxu0 0.0
          %652 = vmatpush2.msra.mxu0 0.0
          %653 = vmatprep.subr.mxu0 0.0
          %654 = vmatpush2.msra.mxu0 0.0
          %655 = vmatprep.subr.mxu0 0.0
          %656 = vmatpush2.msra.mxu0 0.0
          %657 = vmatprep.subr.mxu0 0.0
          %658 = vmatpush2.msra.mxu0 0.0
          %659 = vmatprep.subr.mxu0 0.0
          %660 = vmatpush2.msra.mxu0 0.0
          %661 = vmatprep.subr.mxu0 0.0
          %662 = vmatpush2.msra.mxu0 0.0
          %663 = vmatprep.mubr.f32.mxu0 0.0
          %664 = vmatmul.mubr.f32.gmra.mxu0 %v595
          %v665 = vpop.f32.mrf.mxu0
          %v666 = vadd.f32 0.0, %v665
          %v667 = vpop.f32.mrf.mxu0
          %668 = vdwg.mxu0
          %v669 = vadd.f32 %v587, %v666
          %s670 = scalar_lea.vmem %s2, 24
          %v671 = vld [vmem:[%s670] sm:$0xff]
          %672 = vrot.lane.b32.xlu0 %v432, 125
          %v673 = vpop.permute.xlu0 %672
          %v675 = vsel %vm438, %v671, 0
          %v677 = vsel %vm442, %v673, 0
          %679 = vmatprep.subr.mxu0 0.0
          %680 = vmatpush1.msra.mxu0 0.0
          %681 = vmatprep.subr.mxu0 0.0
          %682 = vmatpush1.msra.mxu0 0.0
          %683 = vmatprep.subr.mxu0 0.0
          %684 = vmatpush1.msra.mxu0 0.0
          %685 = vmatprep.subr.mxu0 0.0
          %686 = vmatpush1.msra.mxu0 0.0
          %687 = vmatprep.subr.mxu0 0.0
          %688 = vmatpush1.msra.mxu0 0.0
          %689 = vmatprep.subr.mxu0 0.0
          %690 = vmatpush1.msra.mxu0 0.0
          %691 = vmatprep.subr.mxu0 0.0
          %692 = vmatpush1.msra.mxu0 0.0
          %693 = vmatprep.subr.mxu0 0.0
          %694 = vmatpush1.msra.mxu0 0.0
          %695 = vmatprep.subr.mxu0 0.0
          %696 = vmatpush1.msra.mxu0 0.0
          %697 = vmatprep.subr.mxu0 0.0
          %698 = vmatpush1.msra.mxu0 0.0
          %699 = vmatprep.subr.mxu0 0.0
          %700 = vmatpush1.msra.mxu0 0.0
          %701 = vmatprep.subr.mxu0 0.0
          %702 = vmatpush1.msra.mxu0 0.0
          %703 = vmatprep.subr.mxu0 0.0
          %704 = vmatpush1.msra.mxu0 0.0
          %705 = vmatprep.subr.mxu0 0.0
          %706 = vmatpush1.msra.mxu0 0.0
          %707 = vmatprep.subr.mxu0 0.0
          %708 = vmatpush1.msra.mxu0 0.0
          %709 = vmatprep.subr.mxu0 0.0
          %710 = vmatpush1.msra.mxu0 %v677
          %711 = vmatprep.subr.mxu0 0.0
          %712 = vmatpush2.msra.mxu0 0.0
          %713 = vmatprep.subr.mxu0 0.0
          %714 = vmatpush2.msra.mxu0 0.0
          %715 = vmatprep.subr.mxu0 0.0
          %716 = vmatpush2.msra.mxu0 0.0
          %717 = vmatprep.subr.mxu0 0.0
          %718 = vmatpush2.msra.mxu0 0.0
          %719 = vmatprep.subr.mxu0 0.0
          %720 = vmatpush2.msra.mxu0 0.0
          %721 = vmatprep.subr.mxu0 0.0
          %722 = vmatpush2.msra.mxu0 0.0
          %723 = vmatprep.subr.mxu0 0.0
          %724 = vmatpush2.msra.mxu0 0.0
          %725 = vmatprep.subr.mxu0 0.0
          %726 = vmatpush2.msra.mxu0 0.0
          %727 = vmatprep.subr.mxu0 0.0
          %728 = vmatpush2.msra.mxu0 0.0
          %729 = vmatprep.subr.mxu0 0.0
          %730 = vmatpush2.msra.mxu0 0.0
          %731 = vmatprep.subr.mxu0 0.0
          %732 = vmatpush2.msra.mxu0 0.0
          %733 = vmatprep.subr.mxu0 0.0
          %734 = vmatpush2.msra.mxu0 0.0
          %735 = vmatprep.subr.mxu0 0.0
          %736 = vmatpush2.msra.mxu0 0.0
          %737 = vmatprep.subr.mxu0 0.0
          %738 = vmatpush2.msra.mxu0 0.0
          %739 = vmatprep.subr.mxu0 0.0
          %740 = vmatpush2.msra.mxu0 0.0
          %741 = vmatprep.subr.mxu0 0.0
          %742 = vmatpush2.msra.mxu0 0.0
          %743 = vmatprep.mubr.f32.mxu0 0.0
          %744 = vmatmul.mubr.f32.gmra.mxu0 %v675
          %v745 = vpop.f32.mrf.mxu0
          %v746 = vadd.f32 0.0, %v745
          %v747 = vpop.f32.mrf.mxu0
          %748 = vdwg.mxu0
          %v749 = vadd.f32 %v669, %v746
          %s750 = scalar_lea.vmem %s2, 32
          %v751 = vld [vmem:[%s750] sm:$0xff]
          %752 = vrot.lane.b32.xlu0 %v432, 124
          %v753 = vpop.permute.xlu0 %752
          %v755 = vsel %vm438, %v751, 0
          %v757 = vsel %vm442, %v753, 0
          %759 = vmatprep.subr.mxu0 0.0
          %760 = vmatpush1.msra.mxu0 0.0
          %761 = vmatprep.subr.mxu0 0.0
          %762 = vmatpush1.msra.mxu0 0.0
          %763 = vmatprep.subr.mxu0 0.0
          %764 = vmatpush1.msra.mxu0 0.0
          %765 = vmatprep.subr.mxu0 0.0
          %766 = vmatpush1.msra.mxu0 0.0
          %767 = vmatprep.subr.mxu0 0.0
          %768 = vmatpush1.msra.mxu0 0.0
          %769 = vmatprep.subr.mxu0 0.0
          %770 = vmatpush1.msra.mxu0 0.0
          %771 = vmatprep.subr.mxu0 0.0
          %772 = vmatpush1.msra.mxu0 0.0
          %773 = vmatprep.subr.mxu0 0.0
          %774 = vmatpush1.msra.mxu0 0.0
          %775 = vmatprep.subr.mxu0 0.0
          %776 = vmatpush1.msra.mxu0 0.0
          %777 = vmatprep.subr.mxu0 0.0
          %778 = vmatpush1.msra.mxu0 0.0
          %779 = vmatprep.subr.mxu0 0.0
          %780 = vmatpush1.msra.mxu0 0.0
          %781 = vmatprep.subr.mxu0 0.0
          %782 = vmatpush1.msra.mxu0 0.0
          %783 = vmatprep.subr.mxu0 0.0
          %784 = vmatpush1.msra.mxu0 0.0
          %785 = vmatprep.subr.mxu0 0.0
          %786 = vmatpush1.msra.mxu0 0.0
          %787 = vmatprep.subr.mxu0 0.0
          %788 = vmatpush1.msra.mxu0 0.0
          %789 = vmatprep.subr.mxu0 0.0
          %790 = vmatpush1.msra.mxu0 %v757
          %791 = vmatprep.subr.mxu0 0.0
          %792 = vmatpush2.msra.mxu0 0.0
          %793 = vmatprep.subr.mxu0 0.0
          %794 = vmatpush2.msra.mxu0 0.0
          %795 = vmatprep.subr.mxu0 0.0
          %796 = vmatpush2.msra.mxu0 0.0
          %797 = vmatprep.subr.mxu0 0.0
          %798 = vmatpush2.msra.mxu0 0.0
          %799 = vmatprep.subr.mxu0 0.0
          %800 = vmatpush2.msra.mxu0 0.0
          %801 = vmatprep.subr.mxu0 0.0
          %802 = vmatpush2.msra.mxu0 0.0
          %803 = vmatprep.subr.mxu0 0.0
          %804 = vmatpush2.msra.mxu0 0.0
          %805 = vmatprep.subr.mxu0 0.0
          %806 = vmatpush2.msra.mxu0 0.0
          %807 = vmatprep.subr.mxu0 0.0
          %808 = vmatpush2.msra.mxu0 0.0
          %809 = vmatprep.subr.mxu0 0.0
          %810 = vmatpush2.msra.mxu0 0.0
          %811 = vmatprep.subr.mxu0 0.0
          %812 = vmatpush2.msra.mxu0 0.0
          %813 = vmatprep.subr.mxu0 0.0
          %814 = vmatpush2.msra.mxu0 0.0
          %815 = vmatprep.subr.mxu0 0.0
          %816 = vmatpush2.msra.mxu0 0.0
          %817 = vmatprep.subr.mxu0 0.0
          %818 = vmatpush2.msra.mxu0 0.0
          %819 = vmatprep.subr.mxu0 0.0
          %820 = vmatpush2.msra.mxu0 0.0
          %821 = vmatprep.subr.mxu0 0.0
          %822 = vmatpush2.msra.mxu0 0.0
          %823 = vmatprep.mubr.f32.mxu0 0.0
          %824 = vmatmul.mubr.f32.gmra.mxu0 %v755
          %v825 = vpop.f32.mrf.mxu0
          %v826 = vadd.f32 0.0, %v825
          %v827 = vpop.f32.mrf.mxu0
          %828 = vdwg.mxu0
          %v829 = vadd.f32 %v749, %v826
          %v830 = vld [vmem:[#allocation4] sm:$0xff]
          %vm831 = vcmask 130048
          %v832 = vsel %vm831, %v829, 0.0
          %833 = vadd.xlane.f32.xlu0 %v832
          %v834 = vpop.xlane.xlu0 %833
          %v835 = vadd.f32 %v830, %v834
          %vm836 = vcmask 7168
          %837 = vst.msk [vmem:[#allocation4] sm:$0xff] %vm836, %v835
          %v838 = vld [vmem:[#allocation4] sm:$0xff]
          %v839 = vmul.f32 %v829, %v829
          %v840 = vsel %vm831, %v839, 0.0
          %841 = vadd.xlane.f32.xlu0 %v840
          %v842 = vpop.xlane.xlu0 %841
          %v843 = vadd.f32 %v838, %v842
          %vm844 = vcmask 15368
          %845 = vst.msk [vmem:[#allocation4] sm:$0xff] %vm844, %v843
          %s846 = smul.u32 %s21, 8
          %s847 = scalar_lea.vmem [#allocation5], %s846
          %848 = vst.msk [vmem:[%s847] sm:$0xff] %vm831, %v829
        $region48: #{resblock_pallas.1} parent=35 // pred_fallthru
          _
        %p849 = scmp.eq.s32.totalorder %s20, 2
        // Predicated region
        $region53: #{resblock_pallas.1} parent=35 // pred_check
          %p850 = pneg %p849
        $region54: #{resblock_pallas.1} parent=35 // pred_check_branch
          %852 = sbr.rel (%p850) target = $region56
        $region55: #{resblock_pallas.1} parent=35 // pred_region
          // Predicated region
          $region57: #{resblock_pallas.1} parent=55 // pred_check
            %p853 = pneg %p195
          $region58: #{resblock_pallas.1} parent=55 // pred_check_branch
            %855 = sbr.rel (%p853) target = $region60
          $region59: #{resblock_pallas.1} parent=55 // pred_region
            %v856 = vld [vmem:[#allocation4] sm:$0xff]
            %v857 = vmul.f32 %v856, 0.03125
            %v858 = vmul.f32 %v857, %v857
            %860 = vrot.lane.b32.xlu0 %v858, 1
            %v861 = vpop.permute.xlu0 %860
            %v863 = vsub.f32 %v857, %v861
            %v864 = vmax.f32 %v863, 0.0
            %v865 = vld [vmem:[%s3] sm:$0xff]
            %v866 = vadd.f32 %v864, 1e-05
            %v867 = vrsqrt.pop %v866
            %869 = vrot.lane.b32.xlu0 %v867, 1
            %v870 = vpop.permute.xlu0 %869
            %v872 = vmul.f32 %v865, %v870
            %874 = vrot.lane.b32.xlu0 %v872, 126
            %v875 = vpop.permute.xlu0 %874
            %vm877 = vcmask 7168
            %878 = vst.msk [vmem:[#allocation4] sm:$0xff] %vm877, %v875
            %v879 = vld [vmem:[%s3] sm:$0xff]
            %v880 = vmul.f32 %v857, %v875
            %882 = vrot.lane.b32.xlu0 %v880, 3
            %v883 = vpop.permute.xlu0 %882
            %v885 = vsub.f32 %v879, %v883
            %887 = vrot.lane.b32.xlu0 %v885, 126
            %v888 = vpop.permute.xlu0 %887
            %vm890 = vcmask 15368
            %891 = vst.msk [vmem:[#allocation4] sm:$0xff] %vm890, %v888
          $region60: #{resblock_pallas.1} parent=55 // pred_fallthru
            _
          %s892 = smul.u32 %s21, 8
          %s893 = scalar_lea.vmem [#allocation5], %s892
          %v894 = vld [vmem:[%s893] sm:$0xff]
          %v895 = vld [vmem:[#allocation4] sm:$0xff]
          %897 = vset.pattern.permute.xlu0 0
          %898 = vperm.xlu0 %897, %v895
          %v899 = vpop.permute.xlu0 %898
          %v901 = vmul.f32 %v894, %v899
          %902 = vset.pattern.permute.xlu0 1
          %903 = vperm.xlu0 %902, %v895
          %v904 = vpop.permute.xlu0 %903
          %v906 = vadd.f32 %v901, %v904
          %vm907 = vcmp.ge.f32.partialorder %v906, 0.0
          %v908 = vmul.f32 %v906, 0.01
          %v909 = vsel %vm907, %v906, %v908
          %v910 = vadd.f32 %v909, %v193
          %vm911 = vcmask 130048
          %912 = vst.msk [vmem:[%s893] sm:$0xff] %vm911, %v910
        $region56: #{resblock_pallas.1} parent=35 // pred_fallthru
          _
        // Predicated region
        $region61: #{resblock_pallas.1} parent=35 // pred_check
          %p913 = pneg %p130
        $region62: #{resblock_pallas.1} parent=35 // pred_check_branch
          %915 = sbr.rel (%p913) target = $region64
        $region63: #{resblock_pallas.1} parent=35 // pred_region
          %s917 = ssub.s32 256, 256
          %918 = vsyncadd [#allocation6], %s917
          %s919 = sshll.u32 [#allocation5], 4
          %s920 = int_to_ptr.vmem [resolvable:$true] %s919
          %925 = dma.vmem_to_hbm [thread:$0]  %s920, 256, %s4, [#allocation6], 128, 128, 8
        $region64: #{resblock_pallas.1} parent=35 // pred_fallthru
          _
        // Predicated region
        $region65: #{resblock_pallas.1} parent=35 // pred_check
          %p926 = pneg %p130
        $region66: #{resblock_pallas.1} parent=35 // pred_check_branch
          %928 = sbr.rel (%p926) target = $region68
        $region67: #{resblock_pallas.1} parent=35 // pred_region
          %929 = dma.done [#allocation6], 256
        $region68: #{resblock_pallas.1} parent=35 // pred_fallthru
          _
      $region36: #{resblock_pallas.1} parent=5 // pred_fallthru
        _
      %p930 = scmp.le.s32.totalorder 2, %s11
      // Predicated region
      $region69: #{resblock_pallas.1} parent=5 // pred_check
        %p931 = pneg %p930
      $region70: #{resblock_pallas.1} parent=5 // pred_check_branch
        %933 = sbr.rel (%p931) target = $region72
      $region71: #{resblock_pallas.1} parent=5 // pred_region
        %s934 = ssub.s32 %s11, 2
      $region72: #{resblock_pallas.1} parent=5 // pred_fallthru
        _
    $region6: #{resblock_pallas.1} parent=1 // loop_footer
      %s15 = sadd.s32 1, %s11
    $region7: #{resblock_pallas.1} parent=1 // loop_footer_branch
      %10 = sbr.rel target = $region3
    $region8: #{resblock_pallas.1} parent=1 // loop_exit
      _
    %935 = vsyncpa [#allocation6], 1
    %s936 = scalar_lea.sflag [#allocation6], 1
    %937 = vsyncpa %s936, 1

</llo_original>
